<compile_context>
chip_gen: v7x
topology: tpu7x:2x2x1
jax: 0.10.0
libtpu: 0.0.40
codegen_flags: <defaults>
</compile_context>

<pallas_src>
import functools
import math

import jax
import jax.numpy as jnp
from jax.experimental import pallas as pl
from jax.experimental.pallas import tpu as pltpu


# --------------------------------------------------------------------------
# Fused Pallas kernel: obs_net + n residual blocks + obs_predict + sigmoid
# + per-row L2 norm against next_state.
# --------------------------------------------------------------------------
def _transition_kernel(state_ref, skill_ref, next_ref,
                       w_state_ref, w_skill_ref, b_obs_ref,
                       blk_w0_ref, blk_b0_ref, blk_w1_ref, blk_b1_ref,
                       w_pred_ref, b_pred_ref,
                       loss_ref, *, n_blocks, neg_slope):
    def mm(x_f32, w_bf16):
        # bf16 MXU matmul with f32 accumulation; activations stay f32 outside.
        return jnp.dot(x_f32.astype(w_bf16.dtype), w_bf16,
                       preferred_element_type=jnp.float32)

    # obs_net: cat(state, skill) @ W  ==  state @ W_state + skill @ W_skill
    h = (mm(state_ref[...], w_state_ref[...])
         + mm(skill_ref[...], w_skill_ref[...])
         + b_obs_ref[...])
    h = jnp.where(h >= 0.0, h, neg_slope * h)            # LeakyReLU(0.1)

    # ResnetBlockFC blocks: h = h + fc1(relu(fc0(relu(h)))) (static unroll)
    for i in range(n_blocks):
        a = jnp.maximum(h, 0.0)
        net = jnp.maximum(mm(a, blk_w0_ref[i]) + blk_b0_ref[i], 0.0)
        h = h + mm(net, blk_w1_ref[i]) + blk_b1_ref[i]

    # obs_predict + sigmoid (manual logistic: exp runs on the EUP)
    logits = mm(h, w_pred_ref[...]) + b_pred_ref[...]
    pred = 1.0 / (1.0 + jnp.exp(-logits))

    # per-row L2 norm against next_state
    diff = pred - next_ref[...]
    loss = jnp.sqrt(jnp.sum(diff * diff, axis=1, keepdims=True))   # (TM, 1)

    # lane-dense writeback: broadcast the per-row scalar across all 128 lanes
    loss_ref[...] = jnp.broadcast_to(loss, loss_ref.shape)


# --------------------------------------------------------------------------
# Parameter init (PyTorch nn.Linear default: U(-1/sqrt(fan_in), 1/sqrt(fan_in)))
# --------------------------------------------------------------------------
def _linear_init(key, fan_in, fan_out):
    kw, kb = jax.random.split(key)
    lim = 1.0 / math.sqrt(fan_in)
    w = jax.random.uniform(kw, (fan_in, fan_out), jnp.float32, -lim, lim)
    b = jax.random.uniform(kb, (1, fan_out), jnp.float32, -lim, lim)
    return w, b


def init_params(key, state_dim=128, skill_dim=64, hidden_dim=128, n_blocks=2):
    keys = jax.random.split(key, 2 + n_blocks)
    k_obs, k_pred, k_blocks = keys[0], keys[1], keys[2:]

    w_obs, b_obs = _linear_init(k_obs, state_dim + skill_dim, hidden_dim)
    w0s, b0s, w1s, b1s = [], [], [], []
    for kb in k_blocks:
        k0, k1 = jax.random.split(kb)
        w0, b0 = _linear_init(k0, hidden_dim, hidden_dim)
        w1, b1 = _linear_init(k1, hidden_dim, hidden_dim)
        w0s.append(w0); b0s.append(b0); w1s.append(w1); b1s.append(b1)
    w_pred, b_pred = _linear_init(k_pred, hidden_dim, state_dim)

    bf16 = lambda x: x.astype(jnp.bfloat16)   # MXU-native weight storage
    return dict(
        w_state=bf16(w_obs[:state_dim]),      # split of the cat() weight
        w_skill=bf16(w_obs[state_dim:]),
        b_obs=b_obs,
        blk_w0=bf16(jnp.stack(w0s)), blk_b0=jnp.stack(b0s),   # (n, K, N) / (n, 1, N)
        blk_w1=bf16(jnp.stack(w1s)), blk_b1=jnp.stack(b1s),
        w_pred=bf16(w_pred), b_pred=b_pred,
    )


# --------------------------------------------------------------------------
# Wrapper: single pallas_call over a 1-D "parallel" batch-tile grid.
# --------------------------------------------------------------------------
def transition_forward(params, state, next_state, skill, neg_slope=0.1):
    b, state_dim = state.shape
    skill_dim = skill.shape[1]
    n_blocks = params["blk_w0"].shape[0]

    tm = 8 if b <= 8 else 128                      # sublane-aligned row tile
    b_pad = ((b + tm - 1) // tm) * tm
    if b_pad != b:
        pad = ((0, b_pad - b), (0, 0))
        state = jnp.pad(state, pad)
        next_state = jnp.pad(next_state, pad)
        skill = jnp.pad(skill, pad)

    grid = (b_pad // tm,)
    row = lambda cols: pl.BlockSpec((tm, cols), lambda i: (i, 0))
    full2 = lambda a: pl.BlockSpec(a.shape, lambda i: (0, 0))
    full3 = lambda a: pl.BlockSpec(a.shape, lambda i: (0, 0, 0))

    loss_slab = pl.pallas_call(
        functools.partial(_transition_kernel,
                          n_blocks=n_blocks, neg_slope=neg_slope),
        out_shape=jax.ShapeDtypeStruct((b_pad, state_dim), jnp.float32),
        grid=grid,
        in_specs=[
            row(state_dim), row(skill_dim), row(state_dim),
            full2(params["w_state"]), full2(params["w_skill"]),
            full2(params["b_obs"]),
            full3(params["blk_w0"]), full3(params["blk_b0"]),
            full3(params["blk_w1"]), full3(params["blk_b1"]),
            full2(params["w_pred"]), full2(params["b_pred"]),
        ],
        out_specs=pl.BlockSpec((tm, state_dim), lambda i: (i, 0)),
        compiler_params=pltpu.CompilerParams(
            dimension_semantics=("parallel",)),
    )(state, skill, next_state,
      params["w_state"], params["w_skill"], params["b_obs"],
      params["blk_w0"], params["blk_b0"], params["blk_w1"], params["blk_b1"],
      params["w_pred"], params["b_pred"])

    return loss_slab[:b, 0]                        # (B,) per-row predict_loss


# --------------------------------------------------------------------------
# Pure-JAX reference (f32 math, same bf16 weights) for a correctness check.
# --------------------------------------------------------------------------
def transition_reference(params, state, next_state, skill, neg_slope=0.1):
    f32 = jnp.float32
    h = (state @ params["w_state"].astype(f32)
         + skill @ params["w_skill"].astype(f32)
         + params["b_obs"])
    h = jnp.where(h >= 0.0, h, neg_slope * h)
    for i in range(params["blk_w0"].shape[0]):
        a = jnp.maximum(h, 0.0)
        net = jnp.maximum(a @ params["blk_w0"][i].astype(f32)
                          + params["blk_b0"][i], 0.0)
        h = h + net @ params["blk_w1"][i].astype(f32) + params["blk_b1"][i]
    pred = jax.nn.sigmoid(h @ params["w_pred"].astype(f32) + params["b_pred"])
    return jnp.linalg.norm(pred - next_state, axis=1)


# --------------------------------------------------------------------------
if __name__ == "__main__":
    key = jax.random.PRNGKey(0)
    k_params, k_state, k_next, k_skill = jax.random.split(key, 4)

    B, STATE_DIM, SKILL_DIM = 2, 128, 64
    state = jax.random.normal(k_state, (B, STATE_DIM), jnp.float32)
    next_state = jax.random.uniform(k_next, (B, STATE_DIM), jnp.float32)
    skill = jax.random.normal(k_skill, (B, SKILL_DIM), jnp.float32)

    params = init_params(k_params, state_dim=STATE_DIM, skill_dim=SKILL_DIM,
                         hidden_dim=128, n_blocks=2)

    predict_loss = transition_forward(params, state, next_state, skill)
    jax.block_until_ready(predict_loss)

    assert predict_loss.shape == (B,)
    assert bool(jnp.all(jnp.isfinite(predict_loss)))

    ref_loss = transition_reference(params, state, next_state, skill)
    assert bool(jnp.allclose(predict_loss, ref_loss, rtol=5e-2, atol=5e-2)), (
        predict_loss, ref_loss)

    print("KERNEL_OK")
</pallas_src>

<mosaic_0001>
module attributes {stable_mosaic.version = 11 : i64} {
  func.func @_transition_kernel(%arg0: i32, %arg1: memref<8x128xf32, #tpu.memory_space<vmem>>, %arg2: memref<8x64xf32, #tpu.memory_space<vmem>>, %arg3: memref<8x128xf32, #tpu.memory_space<vmem>>, %arg4: memref<128x128xbf16, #tpu.memory_space<vmem>>, %arg5: memref<64x128xbf16, #tpu.memory_space<vmem>>, %arg6: memref<1x128xf32, #tpu.memory_space<vmem>>, %arg7: memref<2x128x128xbf16, #tpu.memory_space<vmem>>, %arg8: memref<2x1x128xf32, #tpu.memory_space<vmem>>, %arg9: memref<2x128x128xbf16, #tpu.memory_space<vmem>>, %arg10: memref<2x1x128xf32, #tpu.memory_space<vmem>>, %arg11: memref<128x128xbf16, #tpu.memory_space<vmem>>, %arg12: memref<1x128xf32, #tpu.memory_space<vmem>>, %arg13: memref<8x128xf32, #tpu.memory_space<vmem>>) attributes {dimension_semantics = [#tpu.dimension_semantics<parallel>], iteration_bounds = array<i64: 1>, scalar_prefetch = 0 : i64, scratch_operands = 0 : i64, tpu.core_type = #tpu.core_type<tc>, window_params = [{transform_indices = @transform_0, window_bounds = array<i64: 8, 128>}, {transform_indices = @transform_1, window_bounds = array<i64: 8, 64>}, {transform_indices = @transform_2, window_bounds = array<i64: 8, 128>}, {pipeline_mode = #tpu.pipeline_mode<synchronous>, transform_indices = @transform_3, window_bounds = array<i64: 128, 128>}, {pipeline_mode = #tpu.pipeline_mode<synchronous>, transform_indices = @transform_4, window_bounds = array<i64: 64, 128>}, {pipeline_mode = #tpu.pipeline_mode<synchronous>, transform_indices = @transform_5, window_bounds = array<i64: 1, 128>}, {pipeline_mode = #tpu.pipeline_mode<synchronous>, transform_indices = @transform_6, window_bounds = array<i64: 2, 128, 128>}, {pipeline_mode = #tpu.pipeline_mode<synchronous>, transform_indices = @transform_7, window_bounds = array<i64: 2, 1, 128>}, {pipeline_mode = #tpu.pipeline_mode<synchronous>, transform_indices = @transform_8, window_bounds = array<i64: 2, 128, 128>}, {pipeline_mode = #tpu.pipeline_mode<synchronous>, transform_indices = @transform_9, window_bounds = array<i64: 2, 1, 128>}, {pipeline_mode = #tpu.pipeline_mode<synchronous>, transform_indices = @transform_10, window_bounds = array<i64: 128, 128>}, {pipeline_mode = #tpu.pipeline_mode<synchronous>, transform_indices = @transform_11, window_bounds = array<i64: 1, 128>}, {transform_indices = @transform_12, window_bounds = array<i64: 8, 128>}]} {
    %c0 = arith.constant 0 : index
    %c0_0 = arith.constant 0 : index
    %0 = vector.load %arg1[%c0, %c0_0] : memref<8x128xf32, #tpu.memory_space<vmem>>, vector<8x128xf32>
    %c0_1 = arith.constant 0 : index
    %c0_2 = arith.constant 0 : index
    %1 = vector.load %arg4[%c0_1, %c0_2] : memref<128x128xbf16, #tpu.memory_space<vmem>>, vector<128x128xbf16>
    %2 = arith.truncf %0 : vector<8x128xf32> to vector<8x128xbf16>
    %cst = arith.constant dense<0.000000e+00> : vector<8x128xf32>
    %3 = tpu.matmul %2, %1, %cst {dimension_numbers = #tpu.dot_dimension_numbers<[1], [0], [0], [1], [0, 0, 1, 1], [], []>} : vector<8x128xbf16>, vector<128x128xbf16>, vector<8x128xf32> -> vector<8x128xf32>
    %c0_3 = arith.constant 0 : index
    %c0_4 = arith.constant 0 : index
    %4 = vector.load %arg2[%c0_3, %c0_4] : memref<8x64xf32, #tpu.memory_space<vmem>>, vector<8x64xf32>
    %c0_5 = arith.constant 0 : index
    %c0_6 = arith.constant 0 : index
    %5 = vector.load %arg5[%c0_5, %c0_6] : memref<64x128xbf16, #tpu.memory_space<vmem>>, vector<64x128xbf16>
    %6 = arith.truncf %4 : vector<8x64xf32> to vector<8x64xbf16>
    %cst_7 = arith.constant dense<0.000000e+00> : vector<8x128xf32>
    %7 = tpu.matmul %6, %5, %cst_7 {dimension_numbers = #tpu.dot_dimension_numbers<[1], [0], [0], [1], [0, 0, 1, 1], [], []>} : vector<8x64xbf16>, vector<64x128xbf16>, vector<8x128xf32> -> vector<8x128xf32>
    %8 = arith.addf %3, %7 : vector<8x128xf32>
    %c0_8 = arith.constant 0 : index
    %c0_9 = arith.constant 0 : index
    %9 = vector.load %arg6[%c0_8, %c0_9] : memref<1x128xf32, #tpu.memory_space<vmem>>, vector<1x128xf32>
    %10 = vector.broadcast %9 : vector<1x128xf32> to vector<8x128xf32>
    %11 = arith.addf %8, %10 : vector<8x128xf32>
    %cst_10 = arith.constant 0.000000e+00 : f32
    %12 = vector.broadcast %cst_10 : f32 to vector<8x128xf32>
    %13 = arith.cmpf oge, %11, %12 : vector<8x128xf32>
    %cst_11 = arith.constant 1.000000e-01 : f32
    %14 = vector.broadcast %cst_11 : f32 to vector<8x128xf32>
    %15 = arith.mulf %14, %11 : vector<8x128xf32>
    %16 = arith.select %13, %11, %15 : vector<8x128xi1>, vector<8x128xf32>
    %cst_12 = arith.constant 0.000000e+00 : f32
    %17 = vector.broadcast %cst_12 : f32 to vector<8x128xf32>
    %18 = arith.maximumf %16, %17 : vector<8x128xf32>
    %c0_13 = arith.constant 0 : index
    %c0_14 = arith.constant 0 : index
    %c0_15 = arith.constant 0 : index
    %19 = vector.load %arg7[%c0_13, %c0_14, %c0_15] : memref<2x128x128xbf16, #tpu.memory_space<vmem>>, vector<1x128x128xbf16>
    %20 = vector.shape_cast %19 : vector<1x128x128xbf16> to vector<128x128xbf16>
    %21 = arith.truncf %18 : vector<8x128xf32> to vector<8x128xbf16>
    %cst_16 = arith.constant dense<0.000000e+00> : vector<8x128xf32>
    %22 = tpu.matmul %21, %20, %cst_16 {dimension_numbers = #tpu.dot_dimension_numbers<[1], [0], [0], [1], [0, 0, 1, 1], [], []>} : vector<8x128xbf16>, vector<128x128xbf16>, vector<8x128xf32> -> vector<8x128xf32>
    %c0_17 = arith.constant 0 : index
    %c0_18 = arith.constant 0 : index
    %c0_19 = arith.constant 0 : index
    %23 = vector.load %arg8[%c0_17, %c0_18, %c0_19] : memref<2x1x128xf32, #tpu.memory_space<vmem>>, vector<1x1x128xf32>
    %24 = vector.shape_cast %23 : vector<1x1x128xf32> to vector<1x128xf32>
    %25 = vector.broadcast %24 : vector<1x128xf32> to vector<8x128xf32>
    %26 = arith.addf %22, %25 : vector<8x128xf32>
    %cst_20 = arith.constant 0.000000e+00 : f32
    %27 = vector.broadcast %cst_20 : f32 to vector<8x128xf32>
    %28 = arith.maximumf %26, %27 : vector<8x128xf32>
    %c0_21 = arith.constant 0 : index
    %c0_22 = arith.constant 0 : index
    %c0_23 = arith.constant 0 : index
    %29 = vector.load %arg9[%c0_21, %c0_22, %c0_23] : memref<2x128x128xbf16, #tpu.memory_space<vmem>>, vector<1x128x128xbf16>
    %30 = vector.shape_cast %29 : vector<1x128x128xbf16> to vector<128x128xbf16>
    %31 = arith.truncf %28 : vector<8x128xf32> to vector<8x128xbf16>
    %cst_24 = arith.constant dense<0.000000e+00> : vector<8x128xf32>
    %32 = tpu.matmul %31, %30, %cst_24 {dimension_numbers = #tpu.dot_dimension_numbers<[1], [0], [0], [1], [0, 0, 1, 1], [], []>} : vector<8x128xbf16>, vector<128x128xbf16>, vector<8x128xf32> -> vector<8x128xf32>
    %33 = arith.addf %16, %32 : vector<8x128xf32>
    %c0_25 = arith.constant 0 : index
    %c0_26 = arith.constant 0 : index
    %c0_27 = arith.constant 0 : index
    %34 = vector.load %arg10[%c0_25, %c0_26, %c0_27] : memref<2x1x128xf32, #tpu.memory_space<vmem>>, vector<1x1x128xf32>
    %35 = vector.shape_cast %34 : vector<1x1x128xf32> to vector<1x128xf32>
    %36 = vector.broadcast %35 : vector<1x128xf32> to vector<8x128xf32>
    %37 = arith.addf %33, %36 : vector<8x128xf32>
    %cst_28 = arith.constant 0.000000e+00 : f32
    %38 = vector.broadcast %cst_28 : f32 to vector<8x128xf32>
    %39 = arith.maximumf %37, %38 : vector<8x128xf32>
    %c1 = arith.constant 1 : index
    %c0_29 = arith.constant 0 : index
    %c0_30 = arith.constant 0 : index
    %40 = vector.load %arg7[%c1, %c0_29, %c0_30] : memref<2x128x128xbf16, #tpu.memory_space<vmem>>, vector<1x128x128xbf16>
    %41 = vector.shape_cast %40 : vector<1x128x128xbf16> to vector<128x128xbf16>
    %42 = arith.truncf %39 : vector<8x128xf32> to vector<8x128xbf16>
    %cst_31 = arith.constant dense<0.000000e+00> : vector<8x128xf32>
    %43 = tpu.matmul %42, %41, %cst_31 {dimension_numbers = #tpu.dot_dimension_numbers<[1], [0], [0], [1], [0, 0, 1, 1], [], []>} : vector<8x128xbf16>, vector<128x128xbf16>, vector<8x128xf32> -> vector<8x128xf32>
    %c1_32 = arith.constant 1 : index
    %c0_33 = arith.constant 0 : index
    %c0_34 = arith.constant 0 : index
    %44 = vector.load %arg8[%c1_32, %c0_33, %c0_34] : memref<2x1x128xf32, #tpu.memory_space<vmem>>, vector<1x1x128xf32>
    %45 = vector.shape_cast %44 : vector<1x1x128xf32> to vector<1x128xf32>
    %46 = vector.broadcast %45 : vector<1x128xf32> to vector<8x128xf32>
    %47 = arith.addf %43, %46 : vector<8x128xf32>
    %cst_35 = arith.constant 0.000000e+00 : f32
    %48 = vector.broadcast %cst_35 : f32 to vector<8x128xf32>
    %49 = arith.maximumf %47, %48 : vector<8x128xf32>
    %c1_36 = arith.constant 1 : index
    %c0_37 = arith.constant 0 : index
    %c0_38 = arith.constant 0 : index
    %50 = vector.load %arg9[%c1_36, %c0_37, %c0_38] : memref<2x128x128xbf16, #tpu.memory_space<vmem>>, vector<1x128x128xbf16>
    %51 = vector.shape_cast %50 : vector<1x128x128xbf16> to vector<128x128xbf16>
    %52 = arith.truncf %49 : vector<8x128xf32> to vector<8x128xbf16>
    %cst_39 = arith.constant dense<0.000000e+00> : vector<8x128xf32>
    %53 = tpu.matmul %52, %51, %cst_39 {dimension_numbers = #tpu.dot_dimension_numbers<[1], [0], [0], [1], [0, 0, 1, 1], [], []>} : vector<8x128xbf16>, vector<128x128xbf16>, vector<8x128xf32> -> vector<8x128xf32>
    %54 = arith.addf %37, %53 : vector<8x128xf32>
    %c1_40 = arith.constant 1 : index
    %c0_41 = arith.constant 0 : index
    %c0_42 = arith.constant 0 : index
    %55 = vector.load %arg10[%c1_40, %c0_41, %c0_42] : memref<2x1x128xf32, #tpu.memory_space<vmem>>, vector<1x1x128xf32>
    %56 = vector.shape_cast %55 : vector<1x1x128xf32> to vector<1x128xf32>
    %57 = vector.broadcast %56 : vector<1x128xf32> to vector<8x128xf32>
    %58 = arith.addf %54, %57 : vector<8x128xf32>
    %c0_43 = arith.constant 0 : index
    %c0_44 = arith.constant 0 : index
    %59 = vector.load %arg11[%c0_43, %c0_44] : memref<128x128xbf16, #tpu.memory_space<vmem>>, vector<128x128xbf16>
    %60 = arith.truncf %58 : vector<8x128xf32> to vector<8x128xbf16>
    %cst_45 = arith.constant dense<0.000000e+00> : vector<8x128xf32>
    %61 = tpu.matmul %60, %59, %cst_45 {dimension_numbers = #tpu.dot_dimension_numbers<[1], [0], [0], [1], [0, 0, 1, 1], [], []>} : vector<8x128xbf16>, vector<128x128xbf16>, vector<8x128xf32> -> vector<8x128xf32>
    %c0_46 = arith.constant 0 : index
    %c0_47 = arith.constant 0 : index
    %62 = vector.load %arg12[%c0_46, %c0_47] : memref<1x128xf32, #tpu.memory_space<vmem>>, vector<1x128xf32>
    %63 = vector.broadcast %62 : vector<1x128xf32> to vector<8x128xf32>
    %64 = arith.addf %61, %63 : vector<8x128xf32>
    %cst_48 = arith.constant 0.000000e+00 : f32
    %65 = vector.broadcast %cst_48 : f32 to vector<8x128xf32>
    %66 = arith.subf %65, %64 : vector<8x128xf32>
    %67 = math.exp %66 : vector<8x128xf32>
    %cst_49 = arith.constant 1.000000e+00 : f32
    %68 = vector.broadcast %cst_49 : f32 to vector<8x128xf32>
    %69 = arith.addf %68, %67 : vector<8x128xf32>
    %cst_50 = arith.constant 1.000000e+00 : f32
    %70 = vector.broadcast %cst_50 : f32 to vector<8x128xf32>
    %71 = arith.divf %70, %69 : vector<8x128xf32>
    %c0_51 = arith.constant 0 : index
    %c0_52 = arith.constant 0 : index
    %72 = vector.load %arg3[%c0_51, %c0_52] : memref<8x128xf32, #tpu.memory_space<vmem>>, vector<8x128xf32>
    %73 = arith.subf %71, %72 : vector<8x128xf32>
    %74 = arith.mulf %73, %73 : vector<8x128xf32>
    %cst_53 = arith.constant dense<0.000000e+00> : vector<8xf32>
    %75 = vector.multi_reduction <add>, %74, %cst_53 [1] : vector<8x128xf32> to vector<8xf32>
    %76 = vector.shape_cast %75 : vector<8xf32> to vector<8x1xf32>
    %77 = math.sqrt %76 : vector<8x1xf32>
    %78 = vector.shape_cast %77 : vector<8x1xf32> to vector<8x1xf32>
    %79 = vector.broadcast %78 : vector<8x1xf32> to vector<8x128xf32>
    %c0_54 = arith.constant 0 : index
    %c0_55 = arith.constant 0 : index
    %80 = vector.load %arg13[%c0_54, %c0_55] : memref<8x128xf32, #tpu.memory_space<vmem>>, vector<8x128xf32>
    tpu.vector_store %arg13[%c0_54, %c0_55], %79 {strides = array<i32>} : memref<8x128xf32, #tpu.memory_space<vmem>>, vector<8x128xf32>,
    return
  }
  func.func @transform_0(%arg0: i32) -> (i32, i32) {
    %c0_i32 = arith.constant 0 : i32
    %c0_i32_0 = arith.constant 0 : i32
    return %arg0, %c0_i32 : i32, i32
  }
  func.func @transform_1(%arg0: i32) -> (i32, i32) {
    %c0_i32 = arith.constant 0 : i32
    %c0_i32_0 = arith.constant 0 : i32
    return %arg0, %c0_i32 : i32, i32
  }
  func.func @transform_2(%arg0: i32) -> (i32, i32) {
    %c0_i32 = arith.constant 0 : i32
    %c0_i32_0 = arith.constant 0 : i32
    return %arg0, %c0_i32 : i32, i32
  }
  func.func @transform_3(%arg0: i32) -> (i32, i32) {
    %c0_i32 = arith.constant 0 : i32
    %c0_i32_0 = arith.constant 0 : i32
    %c0_i32_1 = arith.constant 0 : i32
    return %c0_i32, %c0_i32_0 : i32, i32
  }
  func.func @transform_4(%arg0: i32) -> (i32, i32) {
    %c0_i32 = arith.constant 0 : i32
    %c0_i32_0 = arith.constant 0 : i32
    %c0_i32_1 = arith.constant 0 : i32
    return %c0_i32, %c0_i32_0 : i32, i32
  }
  func.func @transform_5(%arg0: i32) -> (i32, i32) {
    %c0_i32 = arith.constant 0 : i32
    %c0_i32_0 = arith.constant 0 : i32
    %c0_i32_1 = arith.constant 0 : i32
    return %c0_i32, %c0_i32_0 : i32, i32
  }
  func.func @transform_6(%arg0: i32) -> (i32, i32, i32) {
    %c0_i32 = arith.constant 0 : i32
    %c0_i32_0 = arith.constant 0 : i32
    %c0_i32_1 = arith.constant 0 : i32
    %c0_i32_2 = arith.constant 0 : i32
    return %c0_i32, %c0_i32_0, %c0_i32_1 : i32, i32, i32
  }
  func.func @transform_7(%arg0: i32) -> (i32, i32, i32) {
    %c0_i32 = arith.constant 0 : i32
    %c0_i32_0 = arith.constant 0 : i32
    %c0_i32_1 = arith.constant 0 : i32
    %c0_i32_2 = arith.constant 0 : i32
    return %c0_i32, %c0_i32_0, %c0_i32_1 : i32, i32, i32
  }
  func.func @transform_8(%arg0: i32) -> (i32, i32, i32) {
    %c0_i32 = arith.constant 0 : i32
    %c0_i32_0 = arith.constant 0 : i32
    %c0_i32_1 = arith.constant 0 : i32
    %c0_i32_2 = arith.constant 0 : i32
    return %c0_i32, %c0_i32_0, %c0_i32_1 : i32, i32, i32
  }
  func.func @transform_9(%arg0: i32) -> (i32, i32, i32) {
    %c0_i32 = arith.constant 0 : i32
    %c0_i32_0 = arith.constant 0 : i32
    %c0_i32_1 = arith.constant 0 : i32
    %c0_i32_2 = arith.constant 0 : i32
    return %c0_i32, %c0_i32_0, %c0_i32_1 : i32, i32, i32
  }
  func.func @transform_10(%arg0: i32) -> (i32, i32) {
    %c0_i32 = arith.constant 0 : i32
    %c0_i32_0 = arith.constant 0 : i32
    %c0_i32_1 = arith.constant 0 : i32
    return %c0_i32, %c0_i32_0 : i32, i32
  }
  func.func @transform_11(%arg0: i32) -> (i32, i32) {
    %c0_i32 = arith.constant 0 : i32
    %c0_i32_0 = arith.constant 0 : i32
    %c0_i32_1 = arith.constant 0 : i32
    return %c0_i32, %c0_i32_0 : i32, i32
  }
  func.func @transform_12(%arg0: i32) -> (i32, i32) {
    %c0_i32 = arith.constant 0 : i32
    %c0_i32_0 = arith.constant 0 : i32
    return %arg0, %c0_i32 : i32, i32
  }
}

</mosaic_0001>

<llo_original>
// kernel: tpu_custom_call.1
$region0: #{tpu_custom_call.1}
  #allocation0 [shape = 'u32[]', space=smem, size = 0x4, offset = 0x4, fixed_abs, tag = 'smem constant byte address 0x4 - core index']
  #allocation1 [shape = 'u32[144,128]{1,0:T(1,128)}', space=vmem, size = 0x12000, scoped, tag = 'internal scratch']
  %s0 = inlined_call_operand.hbm [shape: f32[8,128], index: 0, kind: input, shape index: {}]
  %s1 = inlined_call_operand.hbm [shape: f32[8,64], index: 1, kind: input, shape index: {}]
  %s2 = inlined_call_operand.hbm [shape: f32[8,128], index: 2, kind: input, shape index: {}]
  %s3 = inlined_call_operand.hbm [shape: bf16[128,128], index: 3, kind: input, shape index: {}]
  %s4 = inlined_call_operand.hbm [shape: bf16[64,128], index: 4, kind: input, shape index: {}]
  %s5 = inlined_call_operand.vmem [shape: f32[1,128], index: 5, kind: input, shape index: {}]
  %s6 = inlined_call_operand.hbm [shape: bf16[2,128,128], index: 6, kind: input, shape index: {}]
  %s7 = inlined_call_operand.vmem [shape: f32[2,1,128], index: 7, kind: input, shape index: {}]
  %s8 = inlined_call_operand.hbm [shape: bf16[2,128,128], index: 8, kind: input, shape index: {}]
  %s9 = inlined_call_operand.vmem [shape: f32[2,1,128], index: 9, kind: input, shape index: {}]
  %s10 = inlined_call_operand.hbm [shape: bf16[128,128], index: 10, kind: input, shape index: {}]
  %s11 = inlined_call_operand.vmem [shape: f32[1,128], index: 11, kind: input, shape index: {}]
  %s12 = inlined_call_operand.hbm [shape: f32[8,128], index: 12, kind: output, shape index: {}]
  %s13 = sld [smem:[#allocation0]]
  $region90: #{tpu_custom_call.1} parent=0
    _
  %s15 = ssub.s32 1, %s13
  %s16 = scalar_select 0, %s15, %s13
  $region1: #{tpu_custom_call.1} parent=0
    #allocation2 [shape = 'u8[4096]{0}', space=vmem, size = 0x1000, scoped, tag = 'input window, operand 0, single buffered']
    #allocation3 [shape = 's32[1]{0}', space=sflag, size = 0x4, scoped, tag = 'scoped memory for tpu_custom_call.1']
    #allocation4 [shape = 's32[1]{0}', space=sflag, size = 0x4, scoped, tag = 'scoped memory for tpu_custom_call.1']
    #allocation5 [shape = 'u8[4096]{0}', space=vmem, size = 0x1000, scoped, tag = 'input window, operand 1, single buffered']
    #allocation6 [shape = 's32[1]{0}', space=sflag, size = 0x4, scoped, tag = 'scoped memory for tpu_custom_call.1']
    #allocation7 [shape = 'u8[4096]{0}', space=vmem, size = 0x1000, scoped, tag = 'input window, operand 2, single buffered']
    #allocation8 [shape = 'u8[32768]{0}', space=vmem, size = 0x8000, scoped, tag = 'input window, operand 3, single buffered']
    #allocation9 [shape = 's32[1]{0}', space=sflag, size = 0x4, scoped, tag = 'scoped memory for tpu_custom_call.1']
    #allocation10 [shape = 'u8[16384]{0}', space=vmem, size = 0x4000, scoped, tag = 'input window, operand 4, single buffered']
    #allocation11 [shape = 'u8[65536]{0}', space=vmem, size = 0x10000, scoped, tag = 'input window, operand 6, single buffered']
    #allocation12 [shape = 's32[1]{0}', space=sflag, size = 0x4, scoped, tag = 'scoped memory for tpu_custom_call.1']
    #allocation13 [shape = 'u8[65536]{0}', space=vmem, size = 0x10000, scoped, tag = 'input window, operand 8, single buffered']
    #allocation14 [shape = 'u8[32768]{0}', space=vmem, size = 0x8000, scoped, tag = 'input window, operand 10, single buffered']
    #allocation15 [shape = 's32[1]{0}', space=sflag, size = 0x4, scoped, tag = 'scoped memory for tpu_custom_call.1']
    #allocation16 [shape = 'u8[4096]{0}', space=vmem, size = 0x1000, scoped, tag = 'output window, operand 0, single buffered']
    %17 = vsyncpa [#allocation3], 0
    %18 = vsyncpa [#allocation6], 0
    %19 = vsyncpa [#allocation9], 0
    %20 = vsyncpa [#allocation12], 0
    %21 = vsyncpa [#allocation15], 0
    %22 = vsyncpa [#allocation4], 0
    // Predicated region
    $region2: #{tpu_custom_call.1} parent=1 // pred_check
      _
    $region3: #{tpu_custom_call.1} parent=1 // pred_check_branch
      %24 = sbr.rel (0) target = $region5
    $region4: #{tpu_custom_call.1} parent=1 // pred_region
      %s26 = ssub.s32 128, 128
      %27 = vsyncadd [#allocation3], %s26
      %s29 = sshll.u32 [#allocation2], 4
      %s30 = int_to_ptr.vmem [resolvable:$true] %s29
      %32 = dma.hbm_to_vmem [thread:$0]  %s0, 128, %s30, [#allocation3]
    $region5: #{tpu_custom_call.1} parent=1 // pred_fallthru
      _
    // Predicated region
    $region6: #{tpu_custom_call.1} parent=1 // pred_check
      _
    $region7: #{tpu_custom_call.1} parent=1 // pred_check_branch
      %34 = sbr.rel (0) target = $region9
    $region8: #{tpu_custom_call.1} parent=1 // pred_region
      %s36 = ssub.s32 128, 128
      %37 = vsyncadd [#allocation6], %s36
      %s39 = sshll.u32 [#allocation5], 4
      %s40 = int_to_ptr.vmem [resolvable:$true] %s39
      %42 = dma.hbm_to_vmem [thread:$0]  %s1, 128, %s40, [#allocation6]
    $region9: #{tpu_custom_call.1} parent=1 // pred_fallthru
      _
    // Predicated region
    $region10: #{tpu_custom_call.1} parent=1 // pred_check
      _
    $region11: #{tpu_custom_call.1} parent=1 // pred_check_branch
      %44 = sbr.rel (0) target = $region13
    $region12: #{tpu_custom_call.1} parent=1 // pred_region
      %s46 = ssub.s32 128, 128
      %47 = vsyncadd [#allocation6], %s46
      %s49 = sshll.u32 [#allocation7], 4
      %s50 = int_to_ptr.vmem [resolvable:$true] %s49
      %52 = dma.hbm_to_vmem [thread:$0]  %s2, 128, %s50, [#allocation6]
    $region13: #{tpu_custom_call.1} parent=1 // pred_fallthru
      _
    // Predicated region
    $region14: #{tpu_custom_call.1} parent=1 // pred_check
      _
    $region15: #{tpu_custom_call.1} parent=1 // pred_check_branch
      %54 = sbr.rel (0) target = $region17
    $region16: #{tpu_custom_call.1} parent=1 // pred_region
      %s56 = ssub.s32 1024, 1024
      %57 = vsyncadd [#allocation9], %s56
      %s58 = sshll.u32 [#allocation8], 4
      %s59 = int_to_ptr.vmem [resolvable:$true] %s58
      %64 = dma.hbm_to_vmem [thread:$0]  %s3, 1024, %s59, [#allocation9], 64, 64, 4
    $region17: #{tpu_custom_call.1} parent=1 // pred_fallthru
      _
    // Predicated region
    $region18: #{tpu_custom_call.1} parent=1 // pred_check
      _
    $region19: #{tpu_custom_call.1} parent=1 // pred_check_branch
      %66 = sbr.rel (0) target = $region21
    $region20: #{tpu_custom_call.1} parent=1 // pred_region
      %s68 = ssub.s32 512, 512
      %69 = vsyncadd [#allocation9], %s68
      %s70 = sshll.u32 [#allocation10], 4
      %s71 = int_to_ptr.vmem [resolvable:$true] %s70
      %76 = dma.hbm_to_vmem [thread:$0]  %s4, 512, %s71, [#allocation9], 64, 64, 4
    $region21: #{tpu_custom_call.1} parent=1 // pred_fallthru
      _
    // Predicated region
    $region22: #{tpu_custom_call.1} parent=1 // pred_check
      _
    $region23: #{tpu_custom_call.1} parent=1 // pred_check_branch
      %78 = sbr.rel (0) target = $region25
    $region24: #{tpu_custom_call.1} parent=1 // pred_region
      _
    $region25: #{tpu_custom_call.1} parent=1 // pred_fallthru
      _
    // Predicated region
    $region26: #{tpu_custom_call.1} parent=1 // pred_check
      _
    $region27: #{tpu_custom_call.1} parent=1 // pred_check_branch
      %80 = sbr.rel (0) target = $region29
    $region28: #{tpu_custom_call.1} parent=1 // pred_region
      %s82 = ssub.s32 2048, 2048
      %83 = vsyncadd [#allocation12], %s82
      %s84 = sshll.u32 [#allocation11], 4
      %s85 = int_to_ptr.vmem [resolvable:$true] %s84
      %90 = dma.hbm_to_vmem [thread:$0]  %s6, 2048, %s85, [#allocation12], 64, 64, 4
    $region29: #{tpu_custom_call.1} parent=1 // pred_fallthru
      _
    // Predicated region
    $region30: #{tpu_custom_call.1} parent=1 // pred_check
      _
    $region31: #{tpu_custom_call.1} parent=1 // pred_check_branch
      %92 = sbr.rel (0) target = $region33
    $region32: #{tpu_custom_call.1} parent=1 // pred_region
      _
    $region33: #{tpu_custom_call.1} parent=1 // pred_fallthru
      _
    // Predicated region
    $region34: #{tpu_custom_call.1} parent=1 // pred_check
      _
    $region35: #{tpu_custom_call.1} parent=1 // pred_check_branch
      %94 = sbr.rel (0) target = $region37
    $region36: #{tpu_custom_call.1} parent=1 // pred_region
      %s96 = ssub.s32 2048, 2048
      %97 = vsyncadd [#allocation12], %s96
      %s98 = sshll.u32 [#allocation13], 4
      %s99 = int_to_ptr.vmem [resolvable:$true] %s98
      %104 = dma.hbm_to_vmem [thread:$0]  %s8, 2048, %s99, [#allocation12], 64, 64, 4
    $region37: #{tpu_custom_call.1} parent=1 // pred_fallthru
      _
    // Predicated region
    $region38: #{tpu_custom_call.1} parent=1 // pred_check
      _
    $region39: #{tpu_custom_call.1} parent=1 // pred_check_branch
      %106 = sbr.rel (0) target = $region41
    $region40: #{tpu_custom_call.1} parent=1 // pred_region
      _
    $region41: #{tpu_custom_call.1} parent=1 // pred_fallthru
      _
    // Predicated region
    $region42: #{tpu_custom_call.1} parent=1 // pred_check
      _
    $region43: #{tpu_custom_call.1} parent=1 // pred_check_branch
      %108 = sbr.rel (0) target = $region45
    $region44: #{tpu_custom_call.1} parent=1 // pred_region
      %s110 = ssub.s32 1024, 1024
      %111 = vsyncadd [#allocation15], %s110
      %s112 = sshll.u32 [#allocation14], 4
      %s113 = int_to_ptr.vmem [resolvable:$true] %s112
      %118 = dma.hbm_to_vmem [thread:$0]  %s10, 1024, %s113, [#allocation15], 64, 64, 4
    $region45: #{tpu_custom_call.1} parent=1 // pred_fallthru
      _
    // Predicated region
    $region46: #{tpu_custom_call.1} parent=1 // pred_check
      _
    $region47: #{tpu_custom_call.1} parent=1 // pred_check_branch
      %120 = sbr.rel (0) target = $region49
    $region48: #{tpu_custom_call.1} parent=1 // pred_region
      _
    $region49: #{tpu_custom_call.1} parent=1 // pred_fallthru
      _
    // Predicated region
    $region50: #{tpu_custom_call.1} parent=1 // pred_check
      _
    $region51: #{tpu_custom_call.1} parent=1 // pred_check_branch
      %122 = sbr.rel (0) target = $region53
    $region52: #{tpu_custom_call.1} parent=1 // pred_region
      %123 = dma.done [#allocation3], 128
    $region53: #{tpu_custom_call.1} parent=1 // pred_fallthru
      _
    // Predicated region
    $region54: #{tpu_custom_call.1} parent=1 // pred_check
      _
    $region55: #{tpu_custom_call.1} parent=1 // pred_check_branch
      %125 = sbr.rel (0) target = $region57
    $region56: #{tpu_custom_call.1} parent=1 // pred_region
      %126 = dma.done [#allocation6], 128
    $region57: #{tpu_custom_call.1} parent=1 // pred_fallthru
      _
    // Predicated region
    $region58: #{tpu_custom_call.1} parent=1 // pred_check
      _
    $region59: #{tpu_custom_call.1} parent=1 // pred_check_branch
      %128 = sbr.rel (0) target = $region61
    $region60: #{tpu_custom_call.1} parent=1 // pred_region
      %129 = dma.done [#allocation6], 128
    $region61: #{tpu_custom_call.1} parent=1 // pred_fallthru
      _
    // Predicated region
    $region62: #{tpu_custom_call.1} parent=1 // pred_check
      _
    $region63: #{tpu_custom_call.1} parent=1 // pred_check_branch
      %131 = sbr.rel (0) target = $region65
    $region64: #{tpu_custom_call.1} parent=1 // pred_region
      %132 = dma.done [#allocation9], 1024
    $region65: #{tpu_custom_call.1} parent=1 // pred_fallthru
      _
    // Predicated region
    $region66: #{tpu_custom_call.1} parent=1 // pred_check
      _
    $region67: #{tpu_custom_call.1} parent=1 // pred_check_branch
      %134 = sbr.rel (0) target = $region69
    $region68: #{tpu_custom_call.1} parent=1 // pred_region
      %135 = dma.done [#allocation9], 512
    $region69: #{tpu_custom_call.1} parent=1 // pred_fallthru
      _
    // Predicated region
    $region70: #{tpu_custom_call.1} parent=1 // pred_check
      _
    $region71: #{tpu_custom_call.1} parent=1 // pred_check_branch
      %137 = sbr.rel (0) target = $region73
    $region72: #{tpu_custom_call.1} parent=1 // pred_region
      %138 = dma.done [#allocation12], 2048
    $region73: #{tpu_custom_call.1} parent=1 // pred_fallthru
      _
    // Predicated region
    $region74: #{tpu_custom_call.1} parent=1 // pred_check
      _
    $region75: #{tpu_custom_call.1} parent=1 // pred_check_branch
      %140 = sbr.rel (0) target = $region77
    $region76: #{tpu_custom_call.1} parent=1 // pred_region
      %141 = dma.done [#allocation12], 2048
    $region77: #{tpu_custom_call.1} parent=1 // pred_fallthru
      _
    // Predicated region
    $region78: #{tpu_custom_call.1} parent=1 // pred_check
      _
    $region79: #{tpu_custom_call.1} parent=1 // pred_check_branch
      %143 = sbr.rel (0) target = $region81
    $region80: #{tpu_custom_call.1} parent=1 // pred_region
      %144 = dma.done [#allocation15], 1024
    $region81: #{tpu_custom_call.1} parent=1 // pred_fallthru
      _
    %v146 = vld [vmem:[#allocation2] sm:$0xff]
    %v147 = vld [vmem:[#allocation8] sm:$0xf]
    %v148 = vld [vmem:[#allocation8 + $0x4] sm:$0xf]
    %v149 = vld [vmem:[#allocation8 + $0x8] sm:$0xf]
    %v150 = vld [vmem:[#allocation8 + $0xc] sm:$0xf]
    %v151 = vld [vmem:[#allocation8 + $0x10] sm:$0xf]
    %v152 = vld [vmem:[#allocation8 + $0x14] sm:$0xf]
    %v153 = vld [vmem:[#allocation8 + $0x18] sm:$0xf]
    %v154 = vld [vmem:[#allocation8 + $0x1c] sm:$0xf]
    %v155 = vld [vmem:[#allocation8 + $0x20] sm:$0xf]
    %v156 = vld [vmem:[#allocation8 + $0x24] sm:$0xf]
    %v157 = vld [vmem:[#allocation8 + $0x28] sm:$0xf]
    %v158 = vld [vmem:[#allocation8 + $0x2c] sm:$0xf]
    %v159 = vld [vmem:[#allocation8 + $0x30] sm:$0xf]
    %v160 = vld [vmem:[#allocation8 + $0x34] sm:$0xf]
    %v161 = vld [vmem:[#allocation8 + $0x38] sm:$0xf]
    %v162 = vld [vmem:[#allocation8 + $0x3c] sm:$0xf]
    %v163 = vpack.c.bf16 %v146, %v146
    %v164 = vld [vmem:[#allocation5] sm:$0xff]
    %v165 = vld [vmem:[#allocation10] sm:$0xf]
    %v166 = vld [vmem:[#allocation10 + $0x4] sm:$0xf]
    %v167 = vld [vmem:[#allocation10 + $0x8] sm:$0xf]
    %v168 = vld [vmem:[#allocation10 + $0xc] sm:$0xf]
    %v169 = vld [vmem:[#allocation10 + $0x10] sm:$0xf]
    %v170 = vld [vmem:[#allocation10 + $0x14] sm:$0xf]
    %v171 = vld [vmem:[#allocation10 + $0x18] sm:$0xf]
    %v172 = vld [vmem:[#allocation10 + $0x1c] sm:$0xf]
    %v173 = vpack.c.bf16 %v164, %v164
    %v182 = vunpack.c.l.b16 %v165
    %v183 = vunpack.c.l.b16 %v166
    %v184 = vunpack.c.l.b16 %v167
    %v185 = vunpack.c.l.b16 %v168
    %v186 = vunpack.c.l.b16 %v169
    %v187 = vunpack.c.l.b16 %v170
    %v188 = vunpack.c.l.b16 %v171
    %v189 = vunpack.c.l.b16 %v172
    %v190 = vpack.c.b16 %v183, %v182
    %v191 = vpack.c.b16 %v185, %v184
    %v192 = vpack.c.b16 %v187, %v186
    %v193 = vpack.c.b16 %v189, %v188
    %vm198 = vcmask 523264
    %v200 = vsel %vm198, %v173, 0
    %202 = vmatprep.subr.bf16.mxu0 0
    %203 = vmatpush1.bf16.msra.mxu0 %v190
    %204 = vmatprep.subr.bf16.mxu0 0
    %205 = vmatpush1.bf16.msra.mxu0 %v191
    %206 = vmatprep.subr.bf16.mxu0 0
    %207 = vmatpush1.bf16.msra.mxu0 %v192
    %208 = vmatprep.subr.bf16.mxu0 0
    %209 = vmatpush1.bf16.msra.mxu0 %v193
    %210 = vmatprep.subr.bf16.mxu0 0
    %211 = vmatpush1.bf16.msra.mxu0 0
    %212 = vmatprep.subr.bf16.mxu0 0
    %213 = vmatpush1.bf16.msra.mxu0 0
    %214 = vmatprep.subr.bf16.mxu0 0
    %215 = vmatpush1.bf16.msra.mxu0 0
    %216 = vmatprep.subr.bf16.mxu0 0
    %217 = vmatpush1.bf16.msra.mxu0 0
    %218 = vmatprep.subr.bf16.mxu0 0
    %219 = vmatpush1.bf16.msra.mxu0 0
    %220 = vmatprep.subr.bf16.mxu0 0
    %221 = vmatpush1.bf16.msra.mxu0 0
    %222 = vmatprep.subr.bf16.mxu0 0
    %223 = vmatpush1.bf16.msra.mxu0 0
    %224 = vmatprep.subr.bf16.mxu0 0
    %225 = vmatpush1.bf16.msra.mxu0 0
    %226 = vmatprep.subr.bf16.mxu0 0
    %227 = vmatpush1.bf16.msra.mxu0 0
    %228 = vmatprep.subr.bf16.mxu0 0
    %229 = vmatpush1.bf16.msra.mxu0 0
    %230 = vmatprep.subr.bf16.mxu0 0
    %231 = vmatpush1.bf16.msra.mxu0 0
    %232 = vmatprep.subr.bf16.mxu0 0
    %233 = vmatpush1.bf16.msra.mxu0 0
    %234 = vmatprep.mubr.bf16.mxu0 0
    %235 = vmatmul.mubr.bf16.gmra.mrb[0].mxu0 %v200
    %v236 = vpop.f32.mrb[0].mxu0
    %v237 = vadd.f32 0.0, %v236
    %v238 = vpop.f32.mrb[0].mxu0
    %v239 = vpop.f32.mrb[0].mxu0
    %v240 = vpop.f32.mrb[0].mxu0
    %241 = vdwg.mxu0
    %v258 = vunpack.c.l.b16 %v147
    %v259 = vunpack.c.l.b16 %v148
    %v260 = vunpack.c.l.b16 %v149
    %v261 = vunpack.c.l.b16 %v150
    %v262 = vunpack.c.l.b16 %v151
    %v263 = vunpack.c.l.b16 %v152
    %v264 = vunpack.c.l.b16 %v153
    %v265 = vunpack.c.l.b16 %v154
    %v266 = vunpack.c.l.b16 %v155
    %v267 = vunpack.c.l.b16 %v156
    %v268 = vunpack.c.l.b16 %v157
    %v269 = vunpack.c.l.b16 %v158
    %v270 = vunpack.c.l.b16 %v159
    %v271 = vunpack.c.l.b16 %v160
    %v272 = vunpack.c.l.b16 %v161
    %v273 = vunpack.c.l.b16 %v162
    %v274 = vpack.c.b16 %v259, %v258
    %v275 = vpack.c.b16 %v261, %v260
    %v276 = vpack.c.b16 %v263, %v262
    %v277 = vpack.c.b16 %v265, %v264
    %v278 = vpack.c.b16 %v267, %v266
    %v279 = vpack.c.b16 %v269, %v268
    %v280 = vpack.c.b16 %v271, %v270
    %v281 = vpack.c.b16 %v273, %v272
    %290 = vmatprep.subr.bf16.mxu0 0
    %291 = vmatpush1.bf16.msra.mxu0 %v274
    %292 = vmatprep.subr.bf16.mxu0 0
    %293 = vmatpush1.bf16.msra.mxu0 %v275
    %294 = vmatprep.subr.bf16.mxu0 0
    %295 = vmatpush1.bf16.msra.mxu0 %v276
    %296 = vmatprep.subr.bf16.mxu0 0
    %297 = vmatpush1.bf16.msra.mxu0 %v277
    %298 = vmatprep.subr.bf16.mxu0 0
    %299 = vmatpush1.bf16.msra.mxu0 %v278
    %300 = vmatprep.subr.bf16.mxu0 0
    %301 = vmatpush1.bf16.msra.mxu0 %v279
    %302 = vmatprep.subr.bf16.mxu0 0
    %303 = vmatpush1.bf16.msra.mxu0 %v280
    %304 = vmatprep.subr.bf16.mxu0 0
    %305 = vmatpush1.bf16.msra.mxu0 %v281
    %306 = vmatprep.subr.bf16.mxu0 0
    %307 = vmatpush1.bf16.msra.mxu0 0
    %308 = vmatprep.subr.bf16.mxu0 0
    %309 = vmatpush1.bf16.msra.mxu0 0
    %310 = vmatprep.subr.bf16.mxu0 0
    %311 = vmatpush1.bf16.msra.mxu0 0
    %312 = vmatprep.subr.bf16.mxu0 0
    %313 = vmatpush1.bf16.msra.mxu0 0
    %314 = vmatprep.subr.bf16.mxu0 0
    %315 = vmatpush1.bf16.msra.mxu0 0
    %316 = vmatprep.subr.bf16.mxu0 0
    %317 = vmatpush1.bf16.msra.mxu0 0
    %318 = vmatprep.subr.bf16.mxu0 0
    %319 = vmatpush1.bf16.msra.mxu0 0
    %320 = vmatprep.subr.bf16.mxu0 0
    %321 = vmatpush1.bf16.msra.mxu0 0
    %322 = vmatprep.mubr.bf16.mxu0 0
    %323 = vmatmul.mubr.bf16.gmra.mrb[0].mxu0 %v163
    %v324 = vpop.f32.mrb[0].mxu0
    %v325 = vadd.f32 %v237, %v324
    %v326 = vpop.f32.mrb[0].mxu0
    %v327 = vpop.f32.mrb[0].mxu0
    %v328 = vpop.f32.mrb[0].mxu0
    %329 = vdwg.mxu0
    %v330 = vld [vmem:[%s5] sm:$0x1]
    %v332 = vlaneseq
    %v333 = vshrl.u32 %v332, 7
    %v334 = vsub.s32 0, %v333
    %v335 = vrot.slane %v330, %v334
    %v337 = vadd.f32 %v325, %v335
    %vm338 = vcmp.ge.f32.partialorder %v337, 0.0
    %v339 = vmul.f32 %v337, 0.1
    %v340 = vsel %vm338, %v337, %v339
    %v341 = vmax.f32 %v340, 0.0
    %v342 = vld [vmem:[#allocation11] sm:$0xf]
    %v343 = vld [vmem:[#allocation11 + $0x4] sm:$0xf]
    %v344 = vld [vmem:[#allocation11 + $0x8] sm:$0xf]
    %v345 = vld [vmem:[#allocation11 + $0xc] sm:$0xf]
    %v346 = vld [vmem:[#allocation11 + $0x10] sm:$0xf]
    %v347 = vld [vmem:[#allocation11 + $0x14] sm:$0xf]
    %v348 = vld [vmem:[#allocation11 + $0x18] sm:$0xf]
    %v349 = vld [vmem:[#allocation11 + $0x1c] sm:$0xf]
    %v350 = vld [vmem:[#allocation11 + $0x20] sm:$0xf]
    %v351 = vld [vmem:[#allocation11 + $0x24] sm:$0xf]
    %v352 = vld [vmem:[#allocation11 + $0x28] sm:$0xf]
    %v353 = vld [vmem:[#allocation11 + $0x2c] sm:$0xf]
    %v354 = vld [vmem:[#allocation11 + $0x30] sm:$0xf]
    %v355 = vld [vmem:[#allocation11 + $0x34] sm:$0xf]
    %v356 = vld [vmem:[#allocation11 + $0x38] sm:$0xf]
    %v357 = vld [vmem:[#allocation11 + $0x3c] sm:$0xf]
    %v358 = vpack.c.bf16 %v341, %v341
    %v359 = vld [vmem:[%s7] sm:$0x1]
    %v361 = vlaneseq
    %v362 = vshrl.u32 %v361, 7
    %v363 = vsub.s32 0, %v362
    %v364 = vrot.slane %v359, %v363
    %v382 = vunpack.c.l.b16 %v342
    %v383 = vunpack.c.l.b16 %v343
    %v384 = vunpack.c.l.b16 %v344
    %v385 = vunpack.c.l.b16 %v345
    %v386 = vunpack.c.l.b16 %v346
    %v387 = vunpack.c.l.b16 %v347
    %v388 = vunpack.c.l.b16 %v348
    %v389 = vunpack.c.l.b16 %v349
    %v390 = vunpack.c.l.b16 %v350
    %v391 = vunpack.c.l.b16 %v351
    %v392 = vunpack.c.l.b16 %v352
    %v393 = vunpack.c.l.b16 %v353
    %v394 = vunpack.c.l.b16 %v354
    %v395 = vunpack.c.l.b16 %v355
    %v396 = vunpack.c.l.b16 %v356
    %v397 = vunpack.c.l.b16 %v357
    %v398 = vpack.c.b16 %v383, %v382
    %v399 = vpack.c.b16 %v385, %v384
    %v400 = vpack.c.b16 %v387, %v386
    %v401 = vpack.c.b16 %v389, %v388
    %v402 = vpack.c.b16 %v391, %v390
    %v403 = vpack.c.b16 %v393, %v392
    %v404 = vpack.c.b16 %v395, %v394
    %v405 = vpack.c.b16 %v397, %v396
    %414 = vmatprep.subr.bf16.mxu0 0
    %415 = vmatpush1.bf16.msra.mxu0 %v398
    %416 = vmatprep.subr.bf16.mxu0 0
    %417 = vmatpush1.bf16.msra.mxu0 %v399
    %418 = vmatprep.subr.bf16.mxu0 0
    %419 = vmatpush1.bf16.msra.mxu0 %v400
    %420 = vmatprep.subr.bf16.mxu0 0
    %421 = vmatpush1.bf16.msra.mxu0 %v401
    %422 = vmatprep.subr.bf16.mxu0 0
    %423 = vmatpush1.bf16.msra.mxu0 %v402
    %424 = vmatprep.subr.bf16.mxu0 0
    %425 = vmatpush1.bf16.msra.mxu0 %v403
    %426 = vmatprep.subr.bf16.mxu0 0
    %427 = vmatpush1.bf16.msra.mxu0 %v404
    %428 = vmatprep.subr.bf16.mxu0 0
    %429 = vmatpush1.bf16.msra.mxu0 %v405
    %430 = vmatprep.subr.bf16.mxu0 0
    %431 = vmatpush1.bf16.msra.mxu0 0
    %432 = vmatprep.subr.bf16.mxu0 0
    %433 = vmatpush1.bf16.msra.mxu0 0
    %434 = vmatprep.subr.bf16.mxu0 0
    %435 = vmatpush1.bf16.msra.mxu0 0
    %436 = vmatprep.subr.bf16.mxu0 0
    %437 = vmatpush1.bf16.msra.mxu0 0
    %438 = vmatprep.subr.bf16.mxu0 0
    %439 = vmatpush1.bf16.msra.mxu0 0
    %440 = vmatprep.subr.bf16.mxu0 0
    %441 = vmatpush1.bf16.msra.mxu0 0
    %442 = vmatprep.subr.bf16.mxu0 0
    %443 = vmatpush1.bf16.msra.mxu0 0
    %444 = vmatprep.subr.bf16.mxu0 0
    %445 = vmatpush1.bf16.msra.mxu0 0
    %446 = vmatprep.mubr.bf16.mxu0 0
    %447 = vmatmul.mubr.bf16.gmra.mrb[0].mxu0 %v358
    %v448 = vpop.f32.mrb[0].mxu0
    %v449 = vadd.f32 %v364, %v448
    %v450 = vpop.f32.mrb[0].mxu0
    %v451 = vpop.f32.mrb[0].mxu0
    %v452 = vpop.f32.mrb[0].mxu0
    %453 = vdwg.mxu0
    %v454 = vmax.f32 %v449, 0.0
    %v455 = vld [vmem:[#allocation13] sm:$0xf]
    %v456 = vld [vmem:[#allocation13 + $0x4] sm:$0xf]
    %v457 = vld [vmem:[#allocation13 + $0x8] sm:$0xf]
    %v458 = vld [vmem:[#allocation13 + $0xc] sm:$0xf]
    %v459 = vld [vmem:[#allocation13 + $0x10] sm:$0xf]
    %v460 = vld [vmem:[#allocation13 + $0x14] sm:$0xf]
    %v461 = vld [vmem:[#allocation13 + $0x18] sm:$0xf]
    %v462 = vld [vmem:[#allocation13 + $0x1c] sm:$0xf]
    %v463 = vld [vmem:[#allocation13 + $0x20] sm:$0xf]
    %v464 = vld [vmem:[#allocation13 + $0x24] sm:$0xf]
    %v465 = vld [vmem:[#allocation13 + $0x28] sm:$0xf]
    %v466 = vld [vmem:[#allocation13 + $0x2c] sm:$0xf]
    %v467 = vld [vmem:[#allocation13 + $0x30] sm:$0xf]
    %v468 = vld [vmem:[#allocation13 + $0x34] sm:$0xf]
    %v469 = vld [vmem:[#allocation13 + $0x38] sm:$0xf]
    %v470 = vld [vmem:[#allocation13 + $0x3c] sm:$0xf]
    %v471 = vpack.c.bf16 %v454, %v454
    %v488 = vunpack.c.l.b16 %v455
    %v489 = vunpack.c.l.b16 %v456
    %v490 = vunpack.c.l.b16 %v457
    %v491 = vunpack.c.l.b16 %v458
    %v492 = vunpack.c.l.b16 %v459
    %v493 = vunpack.c.l.b16 %v460
    %v494 = vunpack.c.l.b16 %v461
    %v495 = vunpack.c.l.b16 %v462
    %v496 = vunpack.c.l.b16 %v463
    %v497 = vunpack.c.l.b16 %v464
    %v498 = vunpack.c.l.b16 %v465
    %v499 = vunpack.c.l.b16 %v466
    %v500 = vunpack.c.l.b16 %v467
    %v501 = vunpack.c.l.b16 %v468
    %v502 = vunpack.c.l.b16 %v469
    %v503 = vunpack.c.l.b16 %v470
    %v504 = vpack.c.b16 %v489, %v488
    %v505 = vpack.c.b16 %v491, %v490
    %v506 = vpack.c.b16 %v493, %v492
    %v507 = vpack.c.b16 %v495, %v494
    %v508 = vpack.c.b16 %v497, %v496
    %v509 = vpack.c.b16 %v499, %v498
    %v510 = vpack.c.b16 %v501, %v500
    %v511 = vpack.c.b16 %v503, %v502
    %520 = vmatprep.subr.bf16.mxu0 0
    %521 = vmatpush1.bf16.msra.mxu0 %v504
    %522 = vmatprep.subr.bf16.mxu0 0
    %523 = vmatpush1.bf16.msra.mxu0 %v505
    %524 = vmatprep.subr.bf16.mxu0 0
    %525 = vmatpush1.bf16.msra.mxu0 %v506
    %526 = vmatprep.subr.bf16.mxu0 0
    %527 = vmatpush1.bf16.msra.mxu0 %v507
    %528 = vmatprep.subr.bf16.mxu0 0
    %529 = vmatpush1.bf16.msra.mxu0 %v508
    %530 = vmatprep.subr.bf16.mxu0 0
    %531 = vmatpush1.bf16.msra.mxu0 %v509
    %532 = vmatprep.subr.bf16.mxu0 0
    %533 = vmatpush1.bf16.msra.mxu0 %v510
    %534 = vmatprep.subr.bf16.mxu0 0
    %535 = vmatpush1.bf16.msra.mxu0 %v511
    %536 = vmatprep.subr.bf16.mxu0 0
    %537 = vmatpush1.bf16.msra.mxu0 0
    %538 = vmatprep.subr.bf16.mxu0 0
    %539 = vmatpush1.bf16.msra.mxu0 0
    %540 = vmatprep.subr.bf16.mxu0 0
    %541 = vmatpush1.bf16.msra.mxu0 0
    %542 = vmatprep.subr.bf16.mxu0 0
    %543 = vmatpush1.bf16.msra.mxu0 0
    %544 = vmatprep.subr.bf16.mxu0 0
    %545 = vmatpush1.bf16.msra.mxu0 0
    %546 = vmatprep.subr.bf16.mxu0 0
    %547 = vmatpush1.bf16.msra.mxu0 0
    %548 = vmatprep.subr.bf16.mxu0 0
    %549 = vmatpush1.bf16.msra.mxu0 0
    %550 = vmatprep.subr.bf16.mxu0 0
    %551 = vmatpush1.bf16.msra.mxu0 0
    %552 = vmatprep.mubr.bf16.mxu0 0
    %553 = vmatmul.mubr.bf16.gmra.mrb[0].mxu0 %v471
    %v554 = vpop.f32.mrb[0].mxu0
    %v555 = vadd.f32 0.0, %v554
    %v556 = vpop.f32.mrb[0].mxu0
    %v557 = vpop.f32.mrb[0].mxu0
    %v558 = vpop.f32.mrb[0].mxu0
    %559 = vdwg.mxu0
    %v560 = vadd.f32 %v340, %v555
    %v561 = vld [vmem:[%s9] sm:$0x1]
    %v563 = vlaneseq
    %v564 = vshrl.u32 %v563, 7
    %v565 = vsub.s32 0, %v564
    %v566 = vrot.slane %v561, %v565
    %v568 = vadd.f32 %v560, %v566
    %v569 = vmax.f32 %v568, 0.0
    %s570 = scalar_lea.vmem [#allocation11], 64
    %v571 = vld [vmem:[%s570] sm:$0xf]
    %v572 = vld [vmem:[%s570 + $0x4] sm:$0xf]
    %v573 = vld [vmem:[%s570 + $0x8] sm:$0xf]
    %v574 = vld [vmem:[%s570 + $0xc] sm:$0xf]
    %v575 = vld [vmem:[%s570 + $0x10] sm:$0xf]
    %v576 = vld [vmem:[%s570 + $0x14] sm:$0xf]
    %v577 = vld [vmem:[%s570 + $0x18] sm:$0xf]
    %v578 = vld [vmem:[%s570 + $0x1c] sm:$0xf]
    %v579 = vld [vmem:[%s570 + $0x20] sm:$0xf]
    %v580 = vld [vmem:[%s570 + $0x24] sm:$0xf]
    %v581 = vld [vmem:[%s570 + $0x28] sm:$0xf]
    %v582 = vld [vmem:[%s570 + $0x2c] sm:$0xf]
    %v583 = vld [vmem:[%s570 + $0x30] sm:$0xf]
    %v584 = vld [vmem:[%s570 + $0x34] sm:$0xf]
    %v585 = vld [vmem:[%s570 + $0x38] sm:$0xf]
    %v586 = vld [vmem:[%s570 + $0x3c] sm:$0xf]
    %v587 = vpack.c.bf16 %v569, %v569
    %s588 = scalar_lea.vmem %s7, 1
    %v589 = vld [vmem:[%s588] sm:$0x1]
    %v591 = vlaneseq
    %v592 = vshrl.u32 %v591, 7
    %v593 = vsub.s32 0, %v592
    %v594 = vrot.slane %v589, %v593
    %v612 = vunpack.c.l.b16 %v571
    %v613 = vunpack.c.l.b16 %v572
    %v614 = vunpack.c.l.b16 %v573
    %v615 = vunpack.c.l.b16 %v574
    %v616 = vunpack.c.l.b16 %v575
    %v617 = vunpack.c.l.b16 %v576
    %v618 = vunpack.c.l.b16 %v577
    %v619 = vunpack.c.l.b16 %v578
    %v620 = vunpack.c.l.b16 %v579
    %v621 = vunpack.c.l.b16 %v580
    %v622 = vunpack.c.l.b16 %v581
    %v623 = vunpack.c.l.b16 %v582
    %v624 = vunpack.c.l.b16 %v583
    %v625 = vunpack.c.l.b16 %v584
    %v626 = vunpack.c.l.b16 %v585
    %v627 = vunpack.c.l.b16 %v586
    %v628 = vpack.c.b16 %v613, %v612
    %v629 = vpack.c.b16 %v615, %v614
    %v630 = vpack.c.b16 %v617, %v616
    %v631 = vpack.c.b16 %v619, %v618
    %v632 = vpack.c.b16 %v621, %v620
    %v633 = vpack.c.b16 %v623, %v622
    %v634 = vpack.c.b16 %v625, %v624
    %v635 = vpack.c.b16 %v627, %v626
    %644 = vmatprep.subr.bf16.mxu0 0
    %645 = vmatpush1.bf16.msra.mxu0 %v628
    %646 = vmatprep.subr.bf16.mxu0 0
    %647 = vmatpush1.bf16.msra.mxu0 %v629
    %648 = vmatprep.subr.bf16.mxu0 0
    %649 = vmatpush1.bf16.msra.mxu0 %v630
    %650 = vmatprep.subr.bf16.mxu0 0
    %651 = vmatpush1.bf16.msra.mxu0 %v631
    %652 = vmatprep.subr.bf16.mxu0 0
    %653 = vmatpush1.bf16.msra.mxu0 %v632
    %654 = vmatprep.subr.bf16.mxu0 0
    %655 = vmatpush1.bf16.msra.mxu0 %v633
    %656 = vmatprep.subr.bf16.mxu0 0
    %657 = vmatpush1.bf16.msra.mxu0 %v634
    %658 = vmatprep.subr.bf16.mxu0 0
    %659 = vmatpush1.bf16.msra.mxu0 %v635
    %660 = vmatprep.subr.bf16.mxu0 0
    %661 = vmatpush1.bf16.msra.mxu0 0
    %662 = vmatprep.subr.bf16.mxu0 0
    %663 = vmatpush1.bf16.msra.mxu0 0
    %664 = vmatprep.subr.bf16.mxu0 0
    %665 = vmatpush1.bf16.msra.mxu0 0
    %666 = vmatprep.subr.bf16.mxu0 0
    %667 = vmatpush1.bf16.msra.mxu0 0
    %668 = vmatprep.subr.bf16.mxu0 0
    %669 = vmatpush1.bf16.msra.mxu0 0
    %670 = vmatprep.subr.bf16.mxu0 0
    %671 = vmatpush1.bf16.msra.mxu0 0
    %672 = vmatprep.subr.bf16.mxu0 0
    %673 = vmatpush1.bf16.msra.mxu0 0
    %674 = vmatprep.subr.bf16.mxu0 0
    %675 = vmatpush1.bf16.msra.mxu0 0
    %676 = vmatprep.mubr.bf16.mxu0 0
    %677 = vmatmul.mubr.bf16.gmra.mrb[0].mxu0 %v587
    %v678 = vpop.f32.mrb[0].mxu0
    %v679 = vadd.f32 %v594, %v678
    %v680 = vpop.f32.mrb[0].mxu0
    %v681 = vpop.f32.mrb[0].mxu0
    %v682 = vpop.f32.mrb[0].mxu0
    %683 = vdwg.mxu0
    %v684 = vmax.f32 %v679, 0.0
    %s685 = scalar_lea.vmem [#allocation13], 64
    %v686 = vld [vmem:[%s685] sm:$0xf]
    %v687 = vld [vmem:[%s685 + $0x4] sm:$0xf]
    %v688 = vld [vmem:[%s685 + $0x8] sm:$0xf]
    %v689 = vld [vmem:[%s685 + $0xc] sm:$0xf]
    %v690 = vld [vmem:[%s685 + $0x10] sm:$0xf]
    %v691 = vld [vmem:[%s685 + $0x14] sm:$0xf]
    %v692 = vld [vmem:[%s685 + $0x18] sm:$0xf]
    %v693 = vld [vmem:[%s685 + $0x1c] sm:$0xf]
    %v694 = vld [vmem:[%s685 + $0x20] sm:$0xf]
    %v695 = vld [vmem:[%s685 + $0x24] sm:$0xf]
    %v696 = vld [vmem:[%s685 + $0x28] sm:$0xf]
    %v697 = vld [vmem:[%s685 + $0x2c] sm:$0xf]
    %v698 = vld [vmem:[%s685 + $0x30] sm:$0xf]
    %v699 = vld [vmem:[%s685 + $0x34] sm:$0xf]
    %v700 = vld [vmem:[%s685 + $0x38] sm:$0xf]
    %v701 = vld [vmem:[%s685 + $0x3c] sm:$0xf]
    %v702 = vpack.c.bf16 %v684, %v684
    %v719 = vunpack.c.l.b16 %v686
    %v720 = vunpack.c.l.b16 %v687
    %v721 = vunpack.c.l.b16 %v688
    %v722 = vunpack.c.l.b16 %v689
    %v723 = vunpack.c.l.b16 %v690
    %v724 = vunpack.c.l.b16 %v691
    %v725 = vunpack.c.l.b16 %v692
    %v726 = vunpack.c.l.b16 %v693
    %v727 = vunpack.c.l.b16 %v694
    %v728 = vunpack.c.l.b16 %v695
    %v729 = vunpack.c.l.b16 %v696
    %v730 = vunpack.c.l.b16 %v697
    %v731 = vunpack.c.l.b16 %v698
    %v732 = vunpack.c.l.b16 %v699
    %v733 = vunpack.c.l.b16 %v700
    %v734 = vunpack.c.l.b16 %v701
    %v735 = vpack.c.b16 %v720, %v719
    %v736 = vpack.c.b16 %v722, %v721
    %v737 = vpack.c.b16 %v724, %v723
    %v738 = vpack.c.b16 %v726, %v725
    %v739 = vpack.c.b16 %v728, %v727
    %v740 = vpack.c.b16 %v730, %v729
    %v741 = vpack.c.b16 %v732, %v731
    %v742 = vpack.c.b16 %v734, %v733
    %751 = vmatprep.subr.bf16.mxu0 0
    %752 = vmatpush1.bf16.msra.mxu0 %v735
    %753 = vmatprep.subr.bf16.mxu0 0
    %754 = vmatpush1.bf16.msra.mxu0 %v736
    %755 = vmatprep.subr.bf16.mxu0 0
    %756 = vmatpush1.bf16.msra.mxu0 %v737
    %757 = vmatprep.subr.bf16.mxu0 0
    %758 = vmatpush1.bf16.msra.mxu0 %v738
    %759 = vmatprep.subr.bf16.mxu0 0
    %760 = vmatpush1.bf16.msra.mxu0 %v739
    %761 = vmatprep.subr.bf16.mxu0 0
    %762 = vmatpush1.bf16.msra.mxu0 %v740
    %763 = vmatprep.subr.bf16.mxu0 0
    %764 = vmatpush1.bf16.msra.mxu0 %v741
    %765 = vmatprep.subr.bf16.mxu0 0
    %766 = vmatpush1.bf16.msra.mxu0 %v742
    %767 = vmatprep.subr.bf16.mxu0 0
    %768 = vmatpush1.bf16.msra.mxu0 0
    %769 = vmatprep.subr.bf16.mxu0 0
    %770 = vmatpush1.bf16.msra.mxu0 0
    %771 = vmatprep.subr.bf16.mxu0 0
    %772 = vmatpush1.bf16.msra.mxu0 0
    %773 = vmatprep.subr.bf16.mxu0 0
    %774 = vmatpush1.bf16.msra.mxu0 0
    %775 = vmatprep.subr.bf16.mxu0 0
    %776 = vmatpush1.bf16.msra.mxu0 0
    %777 = vmatprep.subr.bf16.mxu0 0
    %778 = vmatpush1.bf16.msra.mxu0 0
    %779 = vmatprep.subr.bf16.mxu0 0
    %780 = vmatpush1.bf16.msra.mxu0 0
    %781 = vmatprep.subr.bf16.mxu0 0
    %782 = vmatpush1.bf16.msra.mxu0 0
    %783 = vmatprep.mubr.bf16.mxu0 0
    %784 = vmatmul.mubr.bf16.gmra.mrb[0].mxu0 %v702
    %v785 = vpop.f32.mrb[0].mxu0
    %v786 = vadd.f32 0.0, %v785
    %v787 = vpop.f32.mrb[0].mxu0
    %v788 = vpop.f32.mrb[0].mxu0
    %v789 = vpop.f32.mrb[0].mxu0
    %790 = vdwg.mxu0
    %v791 = vadd.f32 %v568, %v786
    %s792 = scalar_lea.vmem %s9, 1
    %v793 = vld [vmem:[%s792] sm:$0x1]
    %v795 = vlaneseq
    %v796 = vshrl.u32 %v795, 7
    %v797 = vsub.s32 0, %v796
    %v798 = vrot.slane %v793, %v797
    %v800 = vadd.f32 %v791, %v798
    %v801 = vld [vmem:[#allocation14] sm:$0xf]
    %v802 = vld [vmem:[#allocation14 + $0x4] sm:$0xf]
    %v803 = vld [vmem:[#allocation14 + $0x8] sm:$0xf]
    %v804 = vld [vmem:[#allocation14 + $0xc] sm:$0xf]
    %v805 = vld [vmem:[#allocation14 + $0x10] sm:$0xf]
    %v806 = vld [vmem:[#allocation14 + $0x14] sm:$0xf]
    %v807 = vld [vmem:[#allocation14 + $0x18] sm:$0xf]
    %v808 = vld [vmem:[#allocation14 + $0x1c] sm:$0xf]
    %v809 = vld [vmem:[#allocation14 + $0x20] sm:$0xf]
    %v810 = vld [vmem:[#allocation14 + $0x24] sm:$0xf]
    %v811 = vld [vmem:[#allocation14 + $0x28] sm:$0xf]
    %v812 = vld [vmem:[#allocation14 + $0x2c] sm:$0xf]
    %v813 = vld [vmem:[#allocation14 + $0x30] sm:$0xf]
    %v814 = vld [vmem:[#allocation14 + $0x34] sm:$0xf]
    %v815 = vld [vmem:[#allocation14 + $0x38] sm:$0xf]
    %v816 = vld [vmem:[#allocation14 + $0x3c] sm:$0xf]
    %v817 = vpack.c.bf16 %v800, %v800
    %v818 = vld [vmem:[%s11] sm:$0x1]
    %v820 = vlaneseq
    %v821 = vshrl.u32 %v820, 7
    %v822 = vsub.s32 0, %v821
    %v823 = vrot.slane %v818, %v822
    %v841 = vunpack.c.l.b16 %v801
    %v842 = vunpack.c.l.b16 %v802
    %v843 = vunpack.c.l.b16 %v803
    %v844 = vunpack.c.l.b16 %v804
    %v845 = vunpack.c.l.b16 %v805
    %v846 = vunpack.c.l.b16 %v806
    %v847 = vunpack.c.l.b16 %v807
    %v848 = vunpack.c.l.b16 %v808
    %v849 = vunpack.c.l.b16 %v809
    %v850 = vunpack.c.l.b16 %v810
    %v851 = vunpack.c.l.b16 %v811
    %v852 = vunpack.c.l.b16 %v812
    %v853 = vunpack.c.l.b16 %v813
    %v854 = vunpack.c.l.b16 %v814
    %v855 = vunpack.c.l.b16 %v815
    %v856 = vunpack.c.l.b16 %v816
    %v857 = vpack.c.b16 %v842, %v841
    %v858 = vpack.c.b16 %v844, %v843
    %v859 = vpack.c.b16 %v846, %v845
    %v860 = vpack.c.b16 %v848, %v847
    %v861 = vpack.c.b16 %v850, %v849
    %v862 = vpack.c.b16 %v852, %v851
    %v863 = vpack.c.b16 %v854, %v853
    %v864 = vpack.c.b16 %v856, %v855
    %873 = vmatprep.subr.bf16.mxu0 0
    %874 = vmatpush1.bf16.msra.mxu0 %v857
    %875 = vmatprep.subr.bf16.mxu0 0
    %876 = vmatpush1.bf16.msra.mxu0 %v858
    %877 = vmatprep.subr.bf16.mxu0 0
    %878 = vmatpush1.bf16.msra.mxu0 %v859
    %879 = vmatprep.subr.bf16.mxu0 0
    %880 = vmatpush1.bf16.msra.mxu0 %v860
    %881 = vmatprep.subr.bf16.mxu0 0
    %882 = vmatpush1.bf16.msra.mxu0 %v861
    %883 = vmatprep.subr.bf16.mxu0 0
    %884 = vmatpush1.bf16.msra.mxu0 %v862
    %885 = vmatprep.subr.bf16.mxu0 0
    %886 = vmatpush1.bf16.msra.mxu0 %v863
    %887 = vmatprep.subr.bf16.mxu0 0
    %888 = vmatpush1.bf16.msra.mxu0 %v864
    %889 = vmatprep.subr.bf16.mxu0 0
    %890 = vmatpush1.bf16.msra.mxu0 0
    %891 = vmatprep.subr.bf16.mxu0 0
    %892 = vmatpush1.bf16.msra.mxu0 0
    %893 = vmatprep.subr.bf16.mxu0 0
    %894 = vmatpush1.bf16.msra.mxu0 0
    %895 = vmatprep.subr.bf16.mxu0 0
    %896 = vmatpush1.bf16.msra.mxu0 0
    %897 = vmatprep.subr.bf16.mxu0 0
    %898 = vmatpush1.bf16.msra.mxu0 0
    %899 = vmatprep.subr.bf16.mxu0 0
    %900 = vmatpush1.bf16.msra.mxu0 0
    %901 = vmatprep.subr.bf16.mxu0 0
    %902 = vmatpush1.bf16.msra.mxu0 0
    %903 = vmatprep.subr.bf16.mxu0 0
    %904 = vmatpush1.bf16.msra.mxu0 0
    %905 = vmatprep.mubr.bf16.mxu0 0
    %906 = vmatmul.mubr.bf16.gmra.mrb[0].mxu0 %v817
    %v907 = vpop.f32.mrb[0].mxu0
    %v908 = vadd.f32 %v823, %v907
    %v909 = vpop.f32.mrb[0].mxu0
    %v910 = vpop.f32.mrb[0].mxu0
    %v911 = vpop.f32.mrb[0].mxu0
    %912 = vdwg.mxu0
    %v913 = vsub.f32 0.0, %v908
    %v914 = vmul.f32 %v913, 1.442695
    %v915 = vpow.pop %v914
    %v916 = vadd.f32 %v915, 1.0
    %v917 = vrcp.pop %v916
    %v918 = vmul.f32 1.0, %v917
    %v919 = vld [vmem:[#allocation7] sm:$0xff]
    %v920 = vsub.f32 %v918, %v919
    %v921 = vmul.f32 %v920, %v920
    %922 = vadd.xlane.f32.xlu0 %v921
    %v923 = vpop.xlane.xlu0 %922
    %v924 = vrsqrt.pop %v923
    %v925 = vmul.f32 %v923, %v924
    %vm926 = vcmp.eq.f32.partialorder %v923, inf
    %v927 = vsel %vm926, %v923, %v925
    %vm928 = vcmp.eq.f32.partialorder %v923, 0.0
    %v929 = vand.u32 %v923, 2147483648
    %v930 = vsel %vm928, %v929, %v927
    %931 = vst [vmem:[#allocation16] sm:$0xff] %v930
    // Predicated region
    $region82: #{tpu_custom_call.1} parent=1 // pred_check
      _
    $region83: #{tpu_custom_call.1} parent=1 // pred_check_branch
      %933 = sbr.rel (0) target = $region85
    $region84: #{tpu_custom_call.1} parent=1 // pred_region
      %s935 = ssub.s32 128, 128
      %936 = vsyncadd [#allocation4], %s935
      %s938 = sshll.u32 [#allocation16], 4
      %s939 = int_to_ptr.vmem [resolvable:$true] %s938
      %941 = dma.vmem_to_hbm [thread:$0]  %s939, 128, %s12, [#allocation4]
    $region85: #{tpu_custom_call.1} parent=1 // pred_fallthru
      _
    // Predicated region
    $region86: #{tpu_custom_call.1} parent=1 // pred_check
      _
    $region87: #{tpu_custom_call.1} parent=1 // pred_check_branch
      %943 = sbr.rel (0) target = $region89
    $region88: #{tpu_custom_call.1} parent=1 // pred_region
      %944 = dma.done [#allocation4], 128
    $region89: #{tpu_custom_call.1} parent=1 // pred_fallthru
      _
    %945 = vsyncpa [#allocation3], 1
    %946 = vsyncpa [#allocation6], 1
    %947 = vsyncpa [#allocation9], 1
    %948 = vsyncpa [#allocation12], 1
    %949 = vsyncpa [#allocation15], 1
    %950 = vsyncpa [#allocation4], 1

</llo_original>
